<compile_context>
chip_gen: v7x
topology: tpu7x:2x2x1
jax: 0.10.0
libtpu: 0.0.40
codegen_flags: <defaults>
</compile_context>

<pallas_src>
import functools

import jax
import jax.numpy as jnp
from jax import lax
from jax.experimental import pallas as pl
from jax.experimental.pallas import tpu as pltpu


def _bilinear_norm_kernel(lhs_ref, rhs_ref, o_ref, *, inv_hw, eps,
                          fuse_epilogue, single_k):
    # lhs_ref: (1, bm, bk)   rhs_ref: (1, Cn, bk)   o_ref: (1, bm, Cn) f32
    # o_ref doubles as the accumulator (resident across the K grid axis).

    def matmul():
        # Single fused MXU matmul: contract the spatial (lane) axis of both
        # operands -> LHS @ RHS^T, accumulated in f32.
        return lax.dot_general(lhs_ref[0], rhs_ref[0], (((1,), (1,)), ((), ())),
                               preferred_element_type=jnp.float32)

    def finalize(acc):
        m = acc * inv_hw                                    # / (H*W)
        if not fuse_epilogue:
            return m                                        # epilogue in wrapper
        # signed sqrt with a single EUP sqrt: sign(m) * sqrt(|m|)
        r = jnp.sqrt(jnp.abs(m))
        s = jnp.where(m < 0, -r, r)
        # L2 norm over the whole flattened (Cx*Cy) vector of this batch item.
        ss = jnp.sum(s * s, keepdims=True)                  # (1, 1)
        # s / max(||s||, eps) == s * rsqrt(max(ss, eps^2))
        return s * lax.rsqrt(jnp.maximum(ss, eps * eps))

    if single_k:
        o_ref[0] = finalize(matmul())
        return

    k = pl.program_id(2)

    @pl.when(k == 0)
    def _init():
        o_ref[...] = jnp.zeros_like(o_ref)

    o_ref[0] += matmul()

    @pl.when(k == pl.num_programs(2) - 1)
    def _finalize():
        o_ref[0] = finalize(o_ref[0])


def _vmem_capacity_bytes():
    try:
        cap = getattr(pltpu.get_tpu_info(), "vmem_capacity_bytes", None)
        if cap:
            return int(cap)
    except Exception:
        pass
    return 64 << 20          # conservative (v7x) fallback


def _pick_block_k(hw, rows_lhs, rows_rhs, itemsize, out_block_bytes, budget_bytes):
    """Pick (block_k, spatial_pad) so double-buffered input tiles fit the budget."""
    per_k_bytes = 2 * (rows_lhs + rows_rhs) * itemsize      # 2 = double-buffering
    avail = budget_bytes - 2 * out_block_bytes
    max_bk = max(avail // max(per_k_bytes, 1), 128)
    max_bk = min(max_bk, 8192)      # per-step overhead already amortized by ~1-2K
    if hw <= max_bk:
        return int(hw), 0           # single K step covering the full spatial extent
    bk = (int(max_bk) // 128) * 128
    # Prefer a 128-aligned divisor of hw (no padding needed).
    cand = bk
    while cand >= 128:
        if hw % cand == 0:
            return int(cand), 0
        cand -= 128
    # Otherwise zero-pad the spatial axis (zeros add nothing to the dot).
    pad = (-hw) % bk
    return int(bk), int(pad)


def bilinear_with_norm(x, y, *, compute_dtype=None, block_k=None, block_m=None,
                       swap_operands=None):
    """x: (B, Cx, H, W); y: (B, Cy, H, W) -> (B, Cx*Cy), matching the PyTorch module."""
    B, ch_x, H, W = x.shape
    By, ch_y, Hy, Wy = y.shape
    assert (B, H, W) == (By, Hy, Wy), "x and y must share batch and spatial dims"
    hw = H * W
    eps = 1e-12
    out_dtype = x.dtype
    cdt = jnp.dtype(compute_dtype) if compute_dtype is not None else jnp.dtype(x.dtype)

    # Free (contiguous) reshapes in the wrapper; the kernel sees (B, C, H*W).
    xm = x.reshape(B, ch_x, hw).astype(cdt)
    ym = y.reshape(B, ch_y, hw).astype(cdt)

    # Lane-dense output: put the larger channel count on the lane (last) axis.
    if swap_operands is None:
        swap_operands = ch_y < ch_x
    if swap_operands:
        lhs, rhs, rows_l, rows_r = ym, xm, ch_y, ch_x
    else:
        lhs, rhs, rows_l, rows_r = xm, ym, ch_x, ch_y

    # Optional split of the LHS-row axis (extra "parallel" grid axis; lets
    # small-batch workloads use both v7x TensorCores).  The L2 norm needs the
    # full row, so in that case the epilogue runs in the wrapper.
    if block_m is None:
        block_m = rows_l
    assert rows_l % block_m == 0, "block_m must divide the lhs channel count"
    assert block_m == rows_l or block_m % 8 == 0, "block_m must be 8-aligned or full"
    num_m = rows_l // block_m
    fuse_epilogue = (num_m == 1)

    itemsize = cdt.itemsize
    out_block_bytes = block_m * rows_r * 4                  # f32 output block
    phys_vmem = _vmem_capacity_bytes()
    budget = min(phys_vmem // 2, 48 << 20)                  # keep headroom (v7x: 64 MiB)

    if block_k is None:
        block_k, pad = _pick_block_k(hw, block_m, rows_r, itemsize,
                                     out_block_bytes, budget)
    else:
        pad = (-hw) % block_k
    if pad:
        lhs = jnp.pad(lhs, ((0, 0), (0, 0), (0, pad)))
        rhs = jnp.pad(rhs, ((0, 0), (0, 0), (0, pad)))
    hw_p = hw + pad
    assert hw_p % block_k == 0
    assert block_k == hw_p or block_k % 128 == 0, "block_k must be 128-aligned or full"
    num_k = hw_p // block_k

    kernel = functools.partial(
        _bilinear_norm_kernel, inv_hw=float(1.0 / hw), eps=eps,
        fuse_epilogue=fuse_epilogue, single_k=(num_k == 1))

    # Explicit VMEM limit matching the chosen tiles (default scoped VMEM is
    # only 16 MiB on v5e / 32 MiB on v6e/v7x).
    need = 2 * (block_m + rows_r) * block_k * itemsize + 2 * out_block_bytes
    vmem_limit = int(min(max(need + (8 << 20), 32 << 20), phys_vmem - (8 << 20)))

    cost = pl.CostEstimate(
        flops=int(2 * B * ch_x * ch_y * hw),
        transcendentals=int(B * ch_x * ch_y + B),           # one sqrt/elem + rsqrt/batch
        bytes_accessed=int((lhs.size + rhs.size) * itemsize + B * ch_x * ch_y * 4),
    )

    out = pl.pallas_call(
        kernel,
        out_shape=jax.ShapeDtypeStruct((B, rows_l, rows_r), jnp.float32),
        grid_spec=pltpu.PrefetchScalarGridSpec(
            num_scalar_prefetch=0,
            grid=(B, num_m, num_k),                         # reduction axis last
            in_specs=[
                pl.BlockSpec((1, block_m, block_k), lambda b, m, k: (b, m, k)),
                pl.BlockSpec((1, rows_r, block_k), lambda b, m, k: (b, 0, k)),
            ],
            out_specs=pl.BlockSpec((1, block_m, rows_r), lambda b, m, k: (b, m, 0)),
        ),
        compiler_params=pltpu.CompilerParams(
            dimension_semantics=("parallel", "parallel", "arbitrary"),
            vmem_limit_bytes=vmem_limit),
        cost_estimate=cost,
    )(lhs, rhs)

    if swap_operands:
        # Restore PyTorch's Cx-major flatten order (norm/sqrt are orientation-invariant).
        out = jnp.transpose(out, (0, 2, 1))
    flat = out.reshape(B, ch_x * ch_y)

    if not fuse_epilogue:
        # Tiny element-wise epilogue when the kernel only produced the scaled
        # bilinear matrix (Cx-split path).
        r = jnp.sqrt(jnp.abs(flat))
        s = jnp.where(flat < 0, -r, r)
        nrm2 = jnp.sum(s * s, axis=1, keepdims=True)
        flat = s * lax.rsqrt(jnp.maximum(nrm2, eps * eps))

    return flat.astype(out_dtype)


def _reference(x, y, eps=1e-12):
    B, cx, H, W = x.shape
    cy = y.shape[1]
    xm = x.reshape(B, cx, H * W)
    ym = y.reshape(B, cy, H * W)
    out = jnp.einsum('bik,bjk->bij', xm, ym,
                     precision=lax.Precision.HIGHEST) / (H * W)
    out = out.reshape(B, -1)
    out = jnp.sqrt(jnp.maximum(out, 0.0)) - jnp.sqrt(jnp.maximum(-out, 0.0))
    nrm = jnp.sqrt(jnp.sum(out * out, axis=1, keepdims=True))
    return out / jnp.maximum(nrm, eps)


if __name__ == "__main__":
    key = jax.random.PRNGKey(0)

    def check(name, out, ref, atol, rtol):
        assert out.shape == ref.shape, f"{name}: shape {out.shape} vs {ref.shape}"
        err = float(jnp.max(jnp.abs(out - ref)))
        assert jnp.allclose(out, ref, atol=atol, rtol=rtol), f"{name}: max abs err={err}"

    # Case 1: f32, fused epilogue, two K grid steps (exercises the accumulator path).
    k1, k2 = jax.random.split(key)
    x = jax.random.normal(k1, (2, 4, 16, 16), jnp.float32)
    y = jax.random.normal(k2, (2, 8, 16, 16), jnp.float32)
    out = jax.block_until_ready(bilinear_with_norm(x, y, block_k=128))
    check("f32/2k", out, _reference(x, y), 1e-5, 1e-5)

    # Case 2: operand-swap path (ch_x > ch_y -> larger channel count on lanes), single K step.
    k3, k4 = jax.random.split(k2)
    x2 = jax.random.normal(k3, (2, 8, 8, 8), jnp.float32)
    y2 = jax.random.normal(k4, (2, 4, 8, 8), jnp.float32)
    out2 = jax.block_until_ready(bilinear_with_norm(x2, y2))
    check("swap/1k", out2, _reference(x2, y2), 1e-5, 1e-5)

    # Case 3: Cx-split grid (epilogue in the wrapper) -- the small-batch v7x path.
    k5, k6 = jax.random.split(k4)
    x3 = jax.random.normal(k5, (1, 16, 8, 8), jnp.float32)
    y3 = jax.random.normal(k6, (1, 8, 8, 8), jnp.float32)
    out3 = jax.block_until_ready(
        bilinear_with_norm(x3, y3, block_m=8, swap_operands=False))
    check("cx-split", out3, _reference(x3, y3), 1e-5, 1e-5)

    # Case 4: bf16 MXU operands with f32 accumulation/epilogue (looser tolerance).
    k7, k8 = jax.random.split(k6)
    x4 = jax.random.normal(k7, (2, 16, 16, 16), jnp.float32)
    y4 = jax.random.normal(k8, (2, 16, 16, 16), jnp.float32)
    out4 = jax.block_until_ready(
        bilinear_with_norm(x4, y4, compute_dtype=jnp.bfloat16, block_k=128))
    check("bf16", out4, _reference(x4, y4), 3e-2, 3e-2)

    print("KERNEL_OK")
</pallas_src>

<mosaic_0001>
module attributes {stable_mosaic.version = 11 : i64} {
  func.func @_bilinear_norm_kernel(%arg0: i32, %arg1: i32, %arg2: i32, %arg3: memref<1x4x128xf32, #tpu.memory_space<vmem>>, %arg4: memref<1x8x128xf32, #tpu.memory_space<vmem>>, %arg5: memref<1x4x8xf32, #tpu.memory_space<vmem>>) attributes {dimension_semantics = [#tpu.dimension_semantics<parallel>, #tpu.dimension_semantics<parallel>, #tpu.dimension_semantics<arbitrary>], iteration_bounds = array<i64: 2, 1, 2>, scalar_prefetch = 0 : i64, scratch_operands = 0 : i64, tpu.core_type = #tpu.core_type<tc>, window_params = [{transform_indices = @transform_0, window_bounds = array<i64: 1, 4, 128>}, {transform_indices = @transform_1, window_bounds = array<i64: 1, 8, 128>}, {transform_indices = @transform_2, window_bounds = array<i64: 1, 4, 8>}]} {
    %c0_i32 = arith.constant 0 : i32
    %0 = arith.cmpi eq, %arg2, %c0_i32 : i32
    %1 = arith.extui %0 : i1 to i32
    %c0_i32_0 = arith.constant 0 : i32
    %2 = arith.cmpi ne, %1, %c0_i32_0 : i32
    scf.if %2 {
      %cst_13 = arith.constant 0.000000e+00 : f32
      %17 = vector.broadcast %cst_13 : f32 to vector<1x4x8xf32>
      %c0_14 = arith.constant 0 : index
      %c0_15 = arith.constant 0 : index
      %c0_16 = arith.constant 0 : index
      %18 = vector.load %arg5[%c0_14, %c0_15, %c0_16] : memref<1x4x8xf32, #tpu.memory_space<vmem>>, vector<1x4x8xf32>
      tpu.vector_store %arg5[%c0_14, %c0_15, %c0_16], %17 {strides = array<i32>} : memref<1x4x8xf32, #tpu.memory_space<vmem>>, vector<1x4x8xf32>,
    } else {
    }
    %c0 = arith.constant 0 : index
    %c0_1 = arith.constant 0 : index
    %c0_2 = arith.constant 0 : index
    %3 = vector.load %arg5[%c0, %c0_1, %c0_2] : memref<1x4x8xf32, #tpu.memory_space<vmem>>, vector<1x4x8xf32>
    %4 = vector.shape_cast %3 : vector<1x4x8xf32> to vector<4x8xf32>
    %c0_3 = arith.constant 0 : index
    %c0_4 = arith.constant 0 : index
    %c0_5 = arith.constant 0 : index
    %5 = vector.load %arg3[%c0_3, %c0_4, %c0_5] : memref<1x4x128xf32, #tpu.memory_space<vmem>>, vector<1x4x128xf32>
    %6 = vector.shape_cast %5 : vector<1x4x128xf32> to vector<4x128xf32>
    %c0_6 = arith.constant 0 : index
    %c0_7 = arith.constant 0 : index
    %c0_8 = arith.constant 0 : index
    %7 = vector.load %arg4[%c0_6, %c0_7, %c0_8] : memref<1x8x128xf32, #tpu.memory_space<vmem>>, vector<1x8x128xf32>
    %8 = vector.shape_cast %7 : vector<1x8x128xf32> to vector<8x128xf32>
    %cst = arith.constant dense<0.000000e+00> : vector<4x8xf32>
    %9 = tpu.matmul %6, %8, %cst {dimension_numbers = #tpu.dot_dimension_numbers<[1], [1], [0], [0], [0, 0, 1, 0], [], []>} : vector<4x128xf32>, vector<8x128xf32>, vector<4x8xf32> -> vector<4x8xf32>
    %10 = arith.addf %4, %9 : vector<4x8xf32>
    %c0_9 = arith.constant 0 : index
    %c0_10 = arith.constant 0 : index
    %c0_11 = arith.constant 0 : index
    %11 = vector.load %arg5[%c0_9, %c0_10, %c0_11] : memref<1x4x8xf32, #tpu.memory_space<vmem>>, vector<1x4x8xf32>
    %12 = vector.shape_cast %11 : vector<1x4x8xf32> to vector<4x8xf32>
    %13 = vector.shape_cast %10 : vector<4x8xf32> to vector<1x4x8xf32>
    tpu.vector_store %arg5[%c0_9, %c0_10, %c0_11], %13 {strides = array<i32>} : memref<1x4x8xf32, #tpu.memory_space<vmem>>, vector<1x4x8xf32>,
    %c1_i32 = arith.constant 1 : i32
    %14 = arith.cmpi eq, %arg2, %c1_i32 : i32
    %15 = arith.extui %14 : i1 to i32
    %c0_i32_12 = arith.constant 0 : i32
    %16 = arith.cmpi ne, %15, %c0_i32_12 : i32
    scf.if %16 {
      %c0_13 = arith.constant 0 : index
      %c0_14 = arith.constant 0 : index
      %c0_15 = arith.constant 0 : index
      %17 = vector.load %arg5[%c0_13, %c0_14, %c0_15] : memref<1x4x8xf32, #tpu.memory_space<vmem>>, vector<1x4x8xf32>
      %18 = vector.shape_cast %17 : vector<1x4x8xf32> to vector<4x8xf32>
      %cst_16 = arith.constant 3.906250e-03 : f32
      %19 = vector.broadcast %cst_16 : f32 to vector<4x8xf32>
      %20 = arith.mulf %18, %19 : vector<4x8xf32>
      %21 = math.absf %20 : vector<4x8xf32>
      %22 = math.sqrt %21 : vector<4x8xf32>
      %cst_17 = arith.constant 0.000000e+00 : f32
      %23 = vector.broadcast %cst_17 : f32 to vector<4x8xf32>
      %24 = arith.cmpf olt, %20, %23 : vector<4x8xf32>
      %cst_18 = arith.constant 0.000000e+00 : f32
      %25 = vector.broadcast %cst_18 : f32 to vector<4x8xf32>
      %26 = arith.subf %25, %22 : vector<4x8xf32>
      %27 = arith.select %24, %26, %22 : vector<4x8xi1>, vector<4x8xf32>
      %28 = arith.mulf %27, %27 : vector<4x8xf32>
      %29 = vector.shape_cast %28 : vector<4x8xf32> to vector<1x4x8xf32>
      %cst_19 = arith.constant dense<0.000000e+00> : vector<1xf32>
      %30 = vector.multi_reduction <add>, %29, %cst_19 [1, 2] : vector<1x4x8xf32> to vector<1xf32>
      %31 = vector.shape_cast %30 : vector<1xf32> to vector<1x1x1xf32>
      %32 = vector.extract %31[0, 0, 0] : f32 from vector<1x1x1xf32>
      %33 = vector.broadcast %32 : f32 to vector<1x1xf32>
      %cst_20 = arith.constant 1.000000e-24 : f32
      %34 = vector.broadcast %cst_20 : f32 to vector<1x1xf32>
      %35 = arith.maximumf %33, %34 : vector<1x1xf32>
      %36 = math.rsqrt %35 : vector<1x1xf32>
      %37 = vector.broadcast %36 : vector<1x1xf32> to vector<4x8xf32>
      %38 = arith.mulf %27, %37 : vector<4x8xf32>
      %c0_21 = arith.constant 0 : index
      %c0_22 = arith.constant 0 : index
      %c0_23 = arith.constant 0 : index
      %39 = vector.load %arg5[%c0_21, %c0_22, %c0_23] : memref<1x4x8xf32, #tpu.memory_space<vmem>>, vector<1x4x8xf32>
      %40 = vector.shape_cast %39 : vector<1x4x8xf32> to vector<4x8xf32>
      %41 = vector.shape_cast %38 : vector<4x8xf32> to vector<1x4x8xf32>
      tpu.vector_store %arg5[%c0_21, %c0_22, %c0_23], %41 {strides = array<i32>} : memref<1x4x8xf32, #tpu.memory_space<vmem>>, vector<1x4x8xf32>,
    } else {
    }
    return
  }
  func.func @transform_0(%arg0: i32, %arg1: i32, %arg2: i32) -> (i32, i32, i32) {
    %c0_i32 = arith.constant 0 : i32
    return %arg0, %arg1, %arg2 : i32, i32, i32
  }
  func.func @transform_1(%arg0: i32, %arg1: i32, %arg2: i32) -> (i32, i32, i32) {
    %c0_i32 = arith.constant 0 : i32
    %c0_i32_0 = arith.constant 0 : i32
    return %arg0, %c0_i32, %arg2 : i32, i32, i32
  }
  func.func @transform_2(%arg0: i32, %arg1: i32, %arg2: i32) -> (i32, i32, i32) {
    %c0_i32 = arith.constant 0 : i32
    %c0_i32_0 = arith.constant 0 : i32
    return %arg0, %arg1, %c0_i32 : i32, i32, i32
  }
}

</mosaic_0001>

<llo_original>
// kernel: tpu_custom_call.1
$region0: #{tpu_custom_call.1}
  #allocation0 [shape = 'u32[]', space=smem, size = 0x4, offset = 0x4, fixed_abs, tag = 'smem constant byte address 0x4 - core index']
  #allocation1 [shape = 'u32[144,128]{1,0:T(1,128)}', space=vmem, size = 0x12000, scoped, tag = 'internal scratch']
  %s0 = inlined_call_operand.hbm [shape: f32[2,4,256], index: 0, kind: input, shape index: {}]
  %s1 = inlined_call_operand.hbm [shape: f32[2,8,256], index: 1, kind: input, shape index: {}]
  %s2 = inlined_call_operand.hbm [shape: f32[2,4,8], index: 2, kind: output, shape index: {}]
  %s3 = sld [smem:[#allocation0]]
  $region57: #{tpu_custom_call.1} parent=0
    _
  %s5 = ssub.s32 1, %s3
  %s6 = scalar_select 0, %s5, %s3
  $region1: #{tpu_custom_call.1} parent=0
    #allocation2 [shape = 'u8[4096]{0}', space=vmem, size = 0x1000, scoped, tag = 'input window, operand 0']
    #allocation3 [shape = 's32[2]{0}', space=sflag, size = 0x8, scoped, tag = 'scoped memory for tpu_custom_call.1']
    #allocation4 [shape = 's32[2]{0}', space=sflag, size = 0x8, scoped, tag = 'scoped memory for tpu_custom_call.1']
    #allocation5 [shape = 'u8[8192]{0}', space=vmem, size = 0x2000, scoped, tag = 'input window, operand 1']
    #allocation6 [shape = 's32[2]{0}', space=sflag, size = 0x8, scoped, tag = 'scoped memory for tpu_custom_call.1']
    #allocation7 [shape = 'u8[4096]{0}', space=vmem, size = 0x1000, scoped, tag = 'output window, operand 0']
    %7 = vsyncpa [#allocation3], 0
    %s8 = scalar_lea.sflag [#allocation3], 1
    %9 = vsyncpa %s8, 0
    %10 = vsyncpa [#allocation6], 0
    %s11 = scalar_lea.sflag [#allocation6], 1
    %12 = vsyncpa %s11, 0
    %13 = vsyncpa [#allocation4], 0
    %s14 = scalar_lea.sflag [#allocation4], 1
    %15 = vsyncpa %s14, 0
    loop: start=0, step=1, limit=6
    $region2: #{tpu_custom_call.1} parent=1 // loop_pre_header
      _
    $region3: #{tpu_custom_call.1} parent=1 // loop_header
      %s17 = sphi 0, %s21
      %p18 = scmp.ge.s32.totalorder %s17, 6
      %s24 = sphi 0, %s43
      %s25 = sphi 0, %s39
      %s26 = sphi 0, %s35
      %s27 = sphi 0, %s24
      %s28 = sphi 0, %s25
      %s29 = sphi 0, %s26
      %s30 = sphi 0, %s27
      %s31 = sphi 0, %s28
      %s32 = sphi 0, %s29
      %s50 = sphi 0, %s52
      %s53 = sphi 0, %s50
      %s54 = sphi 0, %s53
      %s70 = sphi 0, %s54
      %s78 = sphi 0, %s80
      %s81 = sphi 0, %s78
      %s82 = sphi 0, %s81
      %s98 = sphi 0, %s82
      %s106 = sphi 0, %s108
      %s109 = sphi 0, %s106
      %s110 = sphi 0, %s109
      %s126 = sphi 0, %s110
    $region4: #{tpu_custom_call.1} parent=1 // loop_header_branch
      %20 = sbr.rel (%p18) target = $region8
    $region5: #{tpu_custom_call.1} parent=1 // loop_body
      %s22 = ssub.s32 %s17, 1
      %s23 = ssub.s32 %s17, 2
      %s33 = sadd.s32 1, %s26
      %p34 = scmp.ge.s32.totalorder %s33, 2
      %s35 = scalar_select %p34, 0, %s33
      %s36 = sadd.s32 1, %s25
      %s37 = scalar_select %p34, %s36, %s25
      %p38 = scmp.ge.s32.totalorder %s37, 1
      %s39 = scalar_select %p38, 0, %s37
      %s40 = sadd.s32 1, %s24
      %s41 = scalar_select %p38, %s40, %s24
      %p42 = scmp.ge.s32.totalorder %s41, 2
      %s43 = scalar_select %p42, 0, %s41
      %s44 = ssub.s32 %s24, %s43
      %s45 = ssub.s32 %s25, %s39
      %s46 = sor.u32 %s44, %s45
      %s47 = ssub.s32 %s26, %s35
      %s48 = sor.u32 %s46, %s47
      %p49 = scmp.eq.s32.totalorder %s48, 0
      %s51 = sadd.s32 %s50, 1
      %s52 = scalar_select %p49, %s50, %s51
      %p55 = pneg %p49
      %p56 = scmp.eq.s32.totalorder %s17, 3
      %p57 = por %p55, %p56
      %p58 = scmp.ne.s32.totalorder %s50, %s53
      %p59 = scmp.eq.s32.totalorder %s17, 0
      %p60 = por %p58, %p59
      %p61 = scmp.ne.s32.totalorder %s50, %s53
      %p62 = scmp.eq.s32.totalorder %s22, 3
      %p63 = por %p61, %p62
      %p64 = scmp.ne.s32.totalorder %s53, %s54
      %p65 = scmp.eq.s32.totalorder %s22, 0
      %p66 = por %p64, %p65
      %p67 = scmp.ne.s32.totalorder %s53, %s54
      %p68 = scmp.eq.s32.totalorder %s23, 3
      %p69 = por %p67, %p68
      %p71 = scmp.ne.s32.totalorder %s54, %s70
      %p72 = scmp.eq.s32.totalorder %s23, 0
      %p73 = por %p71, %p72
      %s74 = ssub.s32 %s24, %s43
      %s75 = ssub.s32 %s26, %s35
      %s76 = sor.u32 %s74, %s75
      %p77 = scmp.eq.s32.totalorder %s76, 0
      %s79 = sadd.s32 %s78, 1
      %s80 = scalar_select %p77, %s78, %s79
      %p83 = pneg %p77
      %p84 = scmp.eq.s32.totalorder %s17, 3
      %p85 = por %p83, %p84
      %p86 = scmp.ne.s32.totalorder %s78, %s81
      %p87 = scmp.eq.s32.totalorder %s17, 0
      %p88 = por %p86, %p87
      %p89 = scmp.ne.s32.totalorder %s78, %s81
      %p90 = scmp.eq.s32.totalorder %s22, 3
      %p91 = por %p89, %p90
      %p92 = scmp.ne.s32.totalorder %s81, %s82
      %p93 = scmp.eq.s32.totalorder %s22, 0
      %p94 = por %p92, %p93
      %p95 = scmp.ne.s32.totalorder %s81, %s82
      %p96 = scmp.eq.s32.totalorder %s23, 3
      %p97 = por %p95, %p96
      %p99 = scmp.ne.s32.totalorder %s82, %s98
      %p100 = scmp.eq.s32.totalorder %s23, 0
      %p101 = por %p99, %p100
      %s102 = ssub.s32 %s24, %s43
      %s103 = ssub.s32 %s25, %s39
      %s104 = sor.u32 %s102, %s103
      %p105 = scmp.eq.s32.totalorder %s104, 0
      %s107 = sadd.s32 %s106, 1
      %s108 = scalar_select %p105, %s106, %s107
      %p111 = pneg %p105
      %p112 = scmp.eq.s32.totalorder %s17, 3
      %p113 = por %p111, %p112
      %p114 = scmp.ne.s32.totalorder %s106, %s109
      %p115 = scmp.eq.s32.totalorder %s17, 0
      %p116 = por %p114, %p115
      %p117 = scmp.ne.s32.totalorder %s106, %s109
      %p118 = scmp.eq.s32.totalorder %s22, 3
      %p119 = por %p117, %p118
      %p120 = scmp.ne.s32.totalorder %s109, %s110
      %p121 = scmp.eq.s32.totalorder %s22, 0
      %p122 = por %p120, %p121
      %p123 = scmp.ne.s32.totalorder %s109, %s110
      %p124 = scmp.eq.s32.totalorder %s23, 3
      %p125 = por %p123, %p124
      %p127 = scmp.ne.s32.totalorder %s110, %s126
      %p128 = scmp.eq.s32.totalorder %s23, 0
      %p129 = por %p127, %p128
      %p130 = scmp.le.s32.totalorder 1, %s17
      %p131 = scmp.lt.s32.totalorder %s17, 5
      %p132 = pnand %p130, %p131
      %p133 = pneg %p132
      // Predicated region
      $region9: #{tpu_custom_call.1} parent=5 // pred_check
        _
      $region10: #{tpu_custom_call.1} parent=5 // pred_check_branch
        %135 = sbr.rel (%p132) target = $region12
      $region11: #{tpu_custom_call.1} parent=5 // pred_region
        %s136 = ssub.s32 %s17, 1
      $region12: #{tpu_custom_call.1} parent=5 // pred_fallthru
        _
      %p137 = scmp.lt.s32.totalorder %s17, 4
      // Predicated region
      $region13: #{tpu_custom_call.1} parent=5 // pred_check
        %p138 = pneg %p137
      $region14: #{tpu_custom_call.1} parent=5 // pred_check_branch
        %140 = sbr.rel (%p138) target = $region16
      $region15: #{tpu_custom_call.1} parent=5 // pred_region
        // Predicated region
        $region17: #{tpu_custom_call.1} parent=15 // pred_check
          %p141 = pneg %p60
        $region18: #{tpu_custom_call.1} parent=15 // pred_check_branch
          %143 = sbr.rel (%p141) target = $region20
        $region19: #{tpu_custom_call.1} parent=15 // pred_region
          %s144 = sand.u32 %s50, 1
          %s145 = scalar_lea.sflag [#allocation3], %s144
          %s146 = sand.u32 %s50, 1
          %s147 = smul.addr %s146, 4
          %s148 = scalar_lea.vmem [#allocation2], %s147
          %s150 = ssub.s32 64, 64
          %151 = vsyncadd %s145, %s150
          %s152 = smul.addr %s25, 2
          %s153 = sadd.s32 %s26, %s152
          %s154 = smul.addr %s24, 2
          %s155 = sadd.s32 %s153, %s154
          %s156 = smul.addr %s155, 64
          %s157 = scalar_lea.hbm %s0, %s156
          %s159 = sshll.u32 %s148, 4
          %s160 = int_to_ptr.vmem [resolvable:$true] %s159
          %162 = dma.hbm_to_vmem [thread:$0]  %s157, 64, %s160, %s145
        $region20: #{tpu_custom_call.1} parent=15 // pred_fallthru
          _
        // Predicated region
        $region21: #{tpu_custom_call.1} parent=15 // pred_check
          %p163 = pneg %p88
        $region22: #{tpu_custom_call.1} parent=15 // pred_check_branch
          %165 = sbr.rel (%p163) target = $region24
        $region23: #{tpu_custom_call.1} parent=15 // pred_region
          %s166 = sand.u32 %s78, 1
          %s167 = scalar_lea.sflag [#allocation6], %s166
          %s168 = sand.u32 %s78, 1
          %s169 = smul.addr %s168, 8
          %s170 = scalar_lea.vmem [#allocation5], %s169
          %s172 = ssub.s32 128, 128
          %173 = vsyncadd %s167, %s172
          %s174 = smul.addr %s24, 2
          %s175 = sadd.s32 %s26, %s174
          %s176 = smul.addr %s175, 128
          %s177 = scalar_lea.hbm %s1, %s176
          %s179 = sshll.u32 %s170, 4
          %s180 = int_to_ptr.vmem [resolvable:$true] %s179
          %182 = dma.hbm_to_vmem [thread:$0]  %s177, 128, %s180, %s167
        $region24: #{tpu_custom_call.1} parent=15 // pred_fallthru
          _
      $region16: #{tpu_custom_call.1} parent=5 // pred_fallthru
        _
      %p183 = scmp.le.s32.totalorder 1, %s17
      %p184 = scmp.lt.s32.totalorder %s17, 5
      %p185 = pnand %p183, %p184
      %p186 = pneg %p185
      // Predicated region
      $region25: #{tpu_custom_call.1} parent=5 // pred_check
        _
      $region26: #{tpu_custom_call.1} parent=5 // pred_check_branch
        %188 = sbr.rel (%p185) target = $region28
      $region27: #{tpu_custom_call.1} parent=5 // pred_region
        %s189 = ssub.s32 %s17, 1
        %s190 = sand.u32 %s53, 1
        %s191 = scalar_lea.sflag [#allocation3], %s190
        %s192 = sand.u32 %s53, 1
        %s193 = smul.addr %s192, 4
        %s194 = scalar_lea.vmem [#allocation2], %s193
        // Predicated region
        $region29: #{tpu_custom_call.1} parent=27 // pred_check
          %p195 = pneg %p66
        $region30: #{tpu_custom_call.1} parent=27 // pred_check_branch
          %197 = sbr.rel (%p195) target = $region32
        $region31: #{tpu_custom_call.1} parent=27 // pred_region
          %198 = dma.done %s191, 64
        $region32: #{tpu_custom_call.1} parent=27 // pred_fallthru
          _
        %s199 = sand.u32 %s81, 1
        %s200 = scalar_lea.sflag [#allocation6], %s199
        %s201 = sand.u32 %s81, 1
        %s202 = smul.addr %s201, 8
        %s203 = scalar_lea.vmem [#allocation5], %s202
        // Predicated region
        $region33: #{tpu_custom_call.1} parent=27 // pred_check
          %p204 = pneg %p94
        $region34: #{tpu_custom_call.1} parent=27 // pred_check_branch
          %206 = sbr.rel (%p204) target = $region36
        $region35: #{tpu_custom_call.1} parent=27 // pred_region
          %207 = dma.done %s200, 128
        $region36: #{tpu_custom_call.1} parent=27 // pred_fallthru
          _
        %s208 = sand.u32 %s53, 1
        %s209 = scalar_lea.sflag [#allocation3], %s208
        %s210 = sand.u32 %s53, 1
        %s211 = smul.addr %s210, 4
        %s212 = scalar_lea.vmem [#allocation2], %s211
        %p213 = pneg %p66
        %p214 = pneg %p63
        %s215 = sand.u32 %s81, 1
        %s216 = scalar_lea.sflag [#allocation6], %s215
        %s217 = sand.u32 %s81, 1
        %s218 = smul.addr %s217, 8
        %s219 = scalar_lea.vmem [#allocation5], %s218
        %p220 = pneg %p94
        %p221 = pneg %p91
        %p222 = pneg %p122
        %p223 = pneg %p119
        %s224 = sand.u32 %s109, 1
        %s225 = scalar_lea.sflag [#allocation4], %s224
        %s226 = sand.u32 %s109, 1
        %s227 = smul.addr %s226, 4
        %s228 = scalar_lea.vmem [#allocation7], %s227
        %p229 = scmp.eq.s32.totalorder %s29, 0
        // Predicated region
        $region37: #{tpu_custom_call.1} parent=27 // pred_check
          %p230 = pneg %p229
        $region38: #{tpu_custom_call.1} parent=27 // pred_check_branch
          %232 = sbr.rel (%p230) target = $region40
        $region39: #{tpu_custom_call.1} parent=27 // pred_region
          %vm233 = vcmask 60416
          %234 = vst.msk [vmem:[%s228] sm:$0xf] %vm233, 0.0
        $region40: #{tpu_custom_call.1} parent=27 // pred_fallthru
          _
        %v235 = vld [vmem:[%s228] sm:$0xf]
        %v236 = vld [vmem:[%s194] sm:$0xf]
        %v237 = vld [vmem:[%s203] sm:$0xff]
        %238 = vmatprep.subr.mxu0 0.0
        %239 = vmatpush1.xpose.msra.mxu0 %v237
        %240 = vmatprep.subr.mxu0 0.0
        %241 = vmatpush1.xpose.msra.mxu0 0.0
        %242 = vmatprep.subr.mxu0 0.0
        %243 = vmatpush1.xpose.msra.mxu0 0.0
        %244 = vmatprep.subr.mxu0 0.0
        %245 = vmatpush1.xpose.msra.mxu0 0.0
        %246 = vmatprep.subr.mxu0 0.0
        %247 = vmatpush1.xpose.msra.mxu0 0.0
        %248 = vmatprep.subr.mxu0 0.0
        %249 = vmatpush1.xpose.msra.mxu0 0.0
        %250 = vmatprep.subr.mxu0 0.0
        %251 = vmatpush1.xpose.msra.mxu0 0.0
        %252 = vmatprep.subr.mxu0 0.0
        %253 = vmatpush1.xpose.msra.mxu0 0.0
        %254 = vmatprep.subr.mxu0 0.0
        %255 = vmatpush1.xpose.msra.mxu0 0.0
        %256 = vmatprep.subr.mxu0 0.0
        %257 = vmatpush1.xpose.msra.mxu0 0.0
        %258 = vmatprep.subr.mxu0 0.0
        %259 = vmatpush1.xpose.msra.mxu0 0.0
        %260 = vmatprep.subr.mxu0 0.0
        %261 = vmatpush1.xpose.msra.mxu0 0.0
        %262 = vmatprep.subr.mxu0 0.0
        %263 = vmatpush1.xpose.msra.mxu0 0.0
        %264 = vmatprep.subr.mxu0 0.0
        %265 = vmatpush1.xpose.msra.mxu0 0.0
        %266 = vmatprep.subr.mxu0 0.0
        %267 = vmatpush1.xpose.msra.mxu0 0.0
        %268 = vmatprep.subr.mxu0 0.0
        %269 = vmatpush1.xpose.msra.mxu0 0.0
        %270 = vmatprep.subr.mxu0 0.0
        %271 = vmatpush1.xpose.msra.mxu0 0.0
        %272 = vmatprep.subr.mxu0 0.0
        %273 = vmatpush1.xpose.msra.mxu0 0.0
        %274 = vmatprep.subr.mxu0 0.0
        %275 = vmatpush1.xpose.msra.mxu0 0.0
        %276 = vmatprep.subr.mxu0 0.0
        %277 = vmatpush1.xpose.msra.mxu0 0.0
        %278 = vmatprep.subr.mxu0 0.0
        %279 = vmatpush1.xpose.msra.mxu0 0.0
        %280 = vmatprep.subr.mxu0 0.0
        %281 = vmatpush1.xpose.msra.mxu0 0.0
        %282 = vmatprep.subr.mxu0 0.0
        %283 = vmatpush1.xpose.msra.mxu0 0.0
        %284 = vmatprep.subr.mxu0 0.0
        %285 = vmatpush1.xpose.msra.mxu0 0.0
        %286 = vmatprep.subr.mxu0 0.0
        %287 = vmatpush1.xpose.msra.mxu0 0.0
        %288 = vmatprep.subr.mxu0 0.0
        %289 = vmatpush1.xpose.msra.mxu0 0.0
        %290 = vmatprep.subr.mxu0 0.0
        %291 = vmatpush1.xpose.msra.mxu0 0.0
        %292 = vmatprep.subr.mxu0 0.0
        %293 = vmatpush1.xpose.msra.mxu0 0.0
        %294 = vmatprep.subr.mxu0 0.0
        %295 = vmatpush1.xpose.msra.mxu0 0.0
        %296 = vmatprep.subr.mxu0 0.0
        %297 = vmatpush1.xpose.msra.mxu0 0.0
        %298 = vmatprep.subr.mxu0 0.0
        %299 = vmatpush1.xpose.msra.mxu0 0.0
        %300 = vmatprep.subr.mxu0 0.0
        %301 = vmatpush1.xpose.msra.mxu0 0.0
        %302 = vmatprep.mubr.f32.mxu0 0.0
        %303 = vmatmul.mubr.f32.gmra.mrb[0].mxu0 %v236
        %v304 = vpop.f32.mrb[0].mxu0
        %v305 = vadd.f32 0.0, %v304
        %v306 = vpop.f32.mrb[0].mxu0
        %307 = vdwg.mxu0
        %v308 = vadd.f32 %v235, %v305
        %vm309 = vcmask 60416
        %310 = vst.msk [vmem:[%s228] sm:$0xf] %vm309, %v308
        %p311 = scmp.eq.s32.totalorder %s29, 1
        // Predicated region
        $region41: #{tpu_custom_call.1} parent=27 // pred_check
          %p312 = pneg %p311
        $region42: #{tpu_custom_call.1} parent=27 // pred_check_branch
          %314 = sbr.rel (%p312) target = $region44
        $region43: #{tpu_custom_call.1} parent=27 // pred_region
          %v315 = vld [vmem:[%s228] sm:$0xf]
          %v316 = vmul.f32 %v315, 0.00390625
          %v317 = vand.u32 2147483647, %v316
          %v318 = vrsqrt.pop %v317
          %v319 = vmul.f32 %v317, %v318
          %vm320 = vcmp.eq.f32.partialorder %v317, inf
          %v321 = vsel %vm320, %v317, %v319
          %vm322 = vcmp.eq.f32.partialorder %v317, 0.0
          %v323 = vand.u32 %v317, 2147483648
          %v324 = vsel %vm322, %v323, %v321
          %vm325 = vcmp.lt.f32.partialorder %v316, 0.0
          %v326 = vsub.f32 0.0, %v324
          %v327 = vsel %vm325, %v326, %v324
          %v328 = vmul.f32 %v327, %v327
          %v329 = vsel %vm309, %v328, 0.0
          %330 = vadd.xlane.f32.xlu0 %v329
          %v331 = vpop.xlane.xlu0 %330
          %v332 = vrot.slane %v331, 4
          %v333 = vadd.f32 %v331, %v332
          %v334 = vrot.slane %v333, 2
          %v335 = vadd.f32 %v333, %v334
          %v336 = vrot.slane %v335, 1
          %v337 = vadd.f32 %v335, %v336
          %s338 = vtos %v337
          %v339 = vstv %s338
          %v340 = vmax.f32 %v339, 1e-24
          %v341 = vrsqrt.pop %v340
          %v342 = vmul.f32 %v327, %v341
          %343 = vst.msk [vmem:[%s228] sm:$0xf] %vm309, %v342
        $region44: #{tpu_custom_call.1} parent=27 // pred_fallthru
          _
        %s344 = sand.u32 %s109, 1
        %s345 = scalar_lea.sflag [#allocation4], %s344
        %s346 = sand.u32 %s109, 1
        %s347 = smul.addr %s346, 4
        %s348 = scalar_lea.vmem [#allocation7], %s347
        // Predicated region
        $region45: #{tpu_custom_call.1} parent=27 // pred_check
          %p349 = pneg %p119
        $region46: #{tpu_custom_call.1} parent=27 // pred_check_branch
          %351 = sbr.rel (%p349) target = $region48
        $region47: #{tpu_custom_call.1} parent=27 // pred_region
          %s353 = ssub.s32 64, 64
          %354 = vsyncadd %s345, %s353
          %s355 = sadd.s32 %s28, %s27
          %s356 = smul.addr %s355, 64
          %s357 = scalar_lea.hbm %s2, %s356
          %s359 = sshll.u32 %s348, 4
          %s360 = int_to_ptr.vmem [resolvable:$true] %s359
          %362 = dma.vmem_to_hbm [thread:$0]  %s360, 64, %s357, %s345
        $region48: #{tpu_custom_call.1} parent=27 // pred_fallthru
          _
      $region28: #{tpu_custom_call.1} parent=5 // pred_fallthru
        _
      %p363 = scmp.le.s32.totalorder 2, %s17
      // Predicated region
      $region49: #{tpu_custom_call.1} parent=5 // pred_check
        %p364 = pneg %p363
      $region50: #{tpu_custom_call.1} parent=5 // pred_check_branch
        %366 = sbr.rel (%p364) target = $region52
      $region51: #{tpu_custom_call.1} parent=5 // pred_region
        %s367 = ssub.s32 %s17, 2
        // Predicated region
        $region53: #{tpu_custom_call.1} parent=51 // pred_check
          %p368 = pneg %p125
        $region54: #{tpu_custom_call.1} parent=51 // pred_check_branch
          %370 = sbr.rel (%p368) target = $region56
        $region55: #{tpu_custom_call.1} parent=51 // pred_region
          %s371 = sand.u32 %s110, 1
          %s372 = scalar_lea.sflag [#allocation4], %s371
          %s373 = sand.u32 %s110, 1
          %s374 = smul.addr %s373, 4
          %s375 = scalar_lea.vmem [#allocation7], %s374
          %376 = dma.done %s372, 64
        $region56: #{tpu_custom_call.1} parent=51 // pred_fallthru
          _
      $region52: #{tpu_custom_call.1} parent=5 // pred_fallthru
        _
    $region6: #{tpu_custom_call.1} parent=1 // loop_footer
      %s21 = sadd.s32 1, %s17
    $region7: #{tpu_custom_call.1} parent=1 // loop_footer_branch
      %16 = sbr.rel target = $region3
    $region8: #{tpu_custom_call.1} parent=1 // loop_exit
      _
    %377 = vsyncpa [#allocation3], 1
    %s378 = scalar_lea.sflag [#allocation3], 1
    %379 = vsyncpa %s378, 1
    %380 = vsyncpa [#allocation6], 1
    %s381 = scalar_lea.sflag [#allocation6], 1
    %382 = vsyncpa %s381, 1
    %383 = vsyncpa [#allocation4], 1
    %s384 = scalar_lea.sflag [#allocation4], 1
    %385 = vsyncpa %s384, 1

</llo_original>
